<compile_context>
chip_gen: v6e
topology: v6e:2x2x1
jax: 0.10.0
libtpu: 0.0.40
codegen_flags: <defaults>
</compile_context>

<pallas_src>
import math

import numpy as np

import jax
import jax.numpy as jnp
from jax.experimental import pallas as pl
from jax.experimental.pallas import tpu as pltpu

# ----------------------------- problem sizes -----------------------------
B = 2            # batch
S = 8            # sequence length
E = 32           # embed_d
H = 4            # n_heads
DK = E // H      # d_k = 8
CH = E // DK     # 4 DK-wide lane chunks per E-wide row (== H)
RPS = S // CH    # 2 flat-activation rows per (batch, head) slab
BH = B * H       # 8
N = BH * S       # 64 "head rows" (one per (b, h, s'))
R = B * S        # 16 flat activation rows


# ------------------ host-side constant rearrangement matrices ------------------
def _build_constants():
    """0/1 matrices implementing the module's broken .view() head split / un-split
    as matmuls + lane masks.  Built once with numpy; passed as VMEM inputs."""
    n = np.arange(N)
    chunk = (n % S) % CH                                                          # (N,)

    # wrapper-side row gather (replaces the old in-kernel `sel` matmul)
    row_idx = (RPS * (n // S) + (n % S) // CH).astype(np.int32)                   # (N,)

    j3 = np.arange(3 * E)
    chunk_mask = (((j3[None, :] % E) // DK) == chunk[:, None]).astype(np.float32)  # (N, 3E)

    q24 = np.arange(3 * DK)
    coll = ((j3[:, None] // E == q24[None, :] // DK) &
            (j3[:, None] % DK == q24[None, :] % DK)).astype(np.float32)           # (3E, 3DK)

    bd_mask = (n[:, None] // S == n[None, :] // S).astype(np.float32)             # (N, N)
    t = np.arange(S)
    fold = (n[:, None] % S == t[None, :]).astype(np.float32)                      # (N, S)
    spread = np.ascontiguousarray(fold.T)                                         # (S, N)

    e = np.arange(E)
    expand = (e[None, :] % DK == np.arange(DK)[:, None]).astype(np.float32)       # (DK, E)
    chunk_mask_e = ((e[None, :] // DK) == chunk[:, None]).astype(np.float32)      # (N, E)

    r = np.arange(R)
    merge = ((n[None, :] // S == r[:, None] // RPS) &
             ((n[None, :] % S) // CH == r[:, None] % RPS)).astype(np.float32)     # (R, N)

    return {"row_idx": row_idx, "chunk_mask": chunk_mask, "coll": coll,
            "bd_mask": bd_mask, "fold": fold, "spread": spread,
            "expand": expand, "chunk_mask_e": chunk_mask_e, "merge": merge}


_CONST = _build_constants()
_ROW_IDX = _CONST["row_idx"]


# ----------------------------- fused kernel -----------------------------
def _fused_mha_kernel(xsel_ref, wqkv_ref, bqkv_ref, wo_ref, bo_ref,
                      chunk_mask_ref, coll_ref, bd_mask_ref, fold_ref,
                      spread_ref, expand_ref, chunk_mask_e_ref, merge_ref,
                      o_ref):
    f32 = jnp.float32
    xsel = xsel_ref[...]                    # (N, E)  gathered head rows
    bd_mask = bd_mask_ref[...]              # (N, N)  block-diagonal 0/1 mask

    # --- fused QKV projection (1/sqrt(d_k) pre-folded into the Q block) ------------
    qkv = jnp.dot(xsel, wqkv_ref[...], preferred_element_type=f32) + bqkv_ref[...]  # (N, 3E)
    qkv = qkv * chunk_mask_ref[...]                                                  # (N, 3E)

    # --- quirky head split: single fused collapse matmul, then static lane slices ---
    qkvh = jnp.dot(qkv, coll_ref[...], preferred_element_type=f32)   # (N, 3*DK) = (64, 24)
    qf = qkvh[:, 0:DK]                                               # (N, DK)
    kf = qkvh[:, DK:2 * DK]                                          # (N, DK)
    vf = qkvh[:, 2 * DK:3 * DK]                                      # (N, DK)

    # --- lane-dense attention logits: full (N,N) Q.K^T, keep block diagonal,
    #     fold to the compact (N, S) per-head layout -----------------------------------
    full = jax.lax.dot_general(qf, kf, (((1,), (1,)), ((), ())),
                               preferred_element_type=f32)           # (N, N)
    # TODO(synk): add the `mask * -1e9` bias here if a mask semantics is pinned down.
    full = full * bd_mask
    logit = jnp.dot(full, fold_ref[...], preferred_element_type=f32)  # (N, S)

    # --- F.softmax(dim=1): softmax over the HEADS axis of (B, H, S, S) ----------------
    l4 = logit.reshape(B, H, S, S)
    m = jnp.max(l4, axis=1, keepdims=True)
    ex = jnp.exp(l4 - m)
    den = jnp.sum(ex, axis=1, keepdims=True)
    attnw = (ex * pl.reciprocal(den, approx=False)).reshape(N, S)     # (N, S)

    # --- attention scores: spread back to block-diagonal, one dense matmul vs Vflat ---
    attnw_bd = jnp.dot(attnw, spread_ref[...], preferred_element_type=f32) * bd_mask  # (N, N)
    score = jnp.dot(attnw_bd, vf, preferred_element_type=f32)         # (N, DK)

    # --- un-split heads back to the flat (R, E) layout (== .view(B, -1, E)) -----------
    se = jnp.dot(score, expand_ref[...], preferred_element_type=f32) * chunk_mask_e_ref[...]
    score2d = jnp.dot(merge_ref[...], se, preferred_element_type=f32)  # (R, E)

    # --- output projection, lane-dense (R, E) store ------------------------------------
    o_ref[...] = jnp.dot(score2d, wo_ref[...], preferred_element_type=f32) + bo_ref[...]


# ----------------------------- param packing (one-time) -----------------------------
def pack_params(params):
    """One-time prep: QKV concat, 1/sqrt(d_k) fold, and constant upload."""
    scale = 1.0 / math.sqrt(DK)
    packed = {
        "wqkv": jnp.concatenate(
            [params["wq"] * scale, params["wk"], params["wv"]], axis=1),   # (E, 3E)
        "bqkv": jnp.concatenate(
            [params["bq"] * scale, params["bk"], params["bv"]]).reshape(1, 3 * E),
        "wo": params["wo"],
        "bo": params["bo"].reshape(1, E),
    }
    for k in ("chunk_mask", "coll", "bd_mask", "fold", "spread",
              "expand", "chunk_mask_e", "merge"):
        packed[k] = jnp.asarray(_CONST[k])
    return packed


def _cost_estimate():
    flops = 2 * (N * E * 3 * E + N * 3 * E * 3 * DK + N * DK * N + N * N * S
                 + N * S * N + N * N * DK + N * DK * E + R * N * E + R * E * E)
    bytes_accessed = 4 * (N * E + E * 3 * E + 3 * E + E * E + E
                          + N * 3 * E + 3 * E * 3 * DK + N * N + N * S + S * N
                          + DK * E + N * E + R * N + R * E)
    return pl.CostEstimate(flops=flops, transcendentals=B * H * S * S,
                           bytes_accessed=bytes_accessed)


# ----------------------------- wrapper -----------------------------
@jax.jit
def multihead_attention(x, packed):
    """Forward pass of MultiheadAttnetion (fixed intent), x: (B, S, E)."""
    if x.shape != (B, S, E):
        raise ValueError(
            f"kernel is specialized to (B, S, E) = ({B}, {S}, {E}); got {x.shape}")
    x2d = x.reshape(B * S, E)
    # Quirky .view() head-split row duplication as a plain XLA gather (constant indices).
    xsel = x2d[_ROW_IDX]                                              # (N, E)

    vmem = pl.BlockSpec(memory_space=pltpu.MemorySpace.VMEM)
    out2d = pl.pallas_call(
        _fused_mha_kernel,
        out_shape=jax.ShapeDtypeStruct((R, E), jnp.float32),
        in_specs=[vmem] * 13,
        out_specs=vmem,
        cost_estimate=_cost_estimate(),
    )(xsel, packed["wqkv"], packed["bqkv"], packed["wo"], packed["bo"],
      packed["chunk_mask"], packed["coll"], packed["bd_mask"], packed["fold"],
      packed["spread"], packed["expand"], packed["chunk_mask_e"], packed["merge"])
    return out2d.reshape(B, S, E)


# ----------------------------- reference & init -----------------------------
def reference(x, params):
    """Pure-JAX reference with identical (quirky) semantics, HIGHEST precision."""
    hp = jax.lax.Precision.HIGHEST
    x2d = x.reshape(B * S, E)
    q = (jnp.dot(x2d, params["wq"], precision=hp) + params["bq"]).reshape(B, H, S, DK)
    k = (jnp.dot(x2d, params["wk"], precision=hp) + params["bk"]).reshape(B, H, S, DK)
    v = (jnp.dot(x2d, params["wv"], precision=hp) + params["bv"]).reshape(B, H, S, DK)
    logit = jnp.einsum("bhsd,bhtd->bhst", q, k, precision=hp) / math.sqrt(DK)
    w = jax.nn.softmax(logit, axis=1)        # F.softmax(dim=1) -> heads axis
    score = jnp.einsum("bhst,bhtd->bhsd", w, v, precision=hp).reshape(B * S, E)
    out = jnp.dot(score, params["wo"], precision=hp) + params["bo"]
    return out.reshape(B, S, E)


def init_params(key):
    """Deterministic init, PyTorch-Linear-style uniform(+-1/sqrt(fan_in))."""
    bound = 1.0 / math.sqrt(E)
    keys = jax.random.split(key, 8)

    def u(k, shape):
        return jax.random.uniform(k, shape, jnp.float32, -bound, bound)

    return {
        "wq": u(keys[0], (E, E)), "bq": u(keys[1], (E,)),
        "wk": u(keys[2], (E, E)), "bk": u(keys[3], (E,)),
        "wv": u(keys[4], (E, E)), "bv": u(keys[5], (E,)),
        "wo": u(keys[6], (E, E)), "bo": u(keys[7], (E,)),
    }


if __name__ == "__main__":
    root = jax.random.PRNGKey(0)
    k_x, k_p = jax.random.split(root)
    x = jax.random.normal(k_x, (B, S, E), dtype=jnp.float32)
    params = init_params(k_p)
    packed = pack_params(params)             # one-time param prep (outside per-call path)

    out = jax.block_until_ready(multihead_attention(x, packed))
    ref = reference(x, params)

    assert out.shape == (B, S, E)
    # Exact softmax reciprocal; tolerance covers MXU f32 vs HIGHEST-precision reference.
    assert jnp.allclose(out, ref, atol=1e-3, rtol=1e-3), "mismatch vs JAX reference"

    print("KERNEL_OK")
</pallas_src>

<mosaic_0001>
module attributes {stable_mosaic.version = 11 : i64} {
  func.func @_fused_mha_kernel(%arg0: memref<64x32xf32, #tpu.memory_space<vmem>>, %arg1: memref<32x96xf32, #tpu.memory_space<vmem>>, %arg2: memref<1x96xf32, #tpu.memory_space<vmem>>, %arg3: memref<32x32xf32, #tpu.memory_space<vmem>>, %arg4: memref<1x32xf32, #tpu.memory_space<vmem>>, %arg5: memref<64x96xf32, #tpu.memory_space<vmem>>, %arg6: memref<96x24xf32, #tpu.memory_space<vmem>>, %arg7: memref<64x64xf32, #tpu.memory_space<vmem>>, %arg8: memref<64x8xf32, #tpu.memory_space<vmem>>, %arg9: memref<8x64xf32, #tpu.memory_space<vmem>>, %arg10: memref<8x32xf32, #tpu.memory_space<vmem>>, %arg11: memref<64x32xf32, #tpu.memory_space<vmem>>, %arg12: memref<16x64xf32, #tpu.memory_space<vmem>>, %arg13: memref<16x32xf32, #tpu.memory_space<vmem>>) attributes {dimension_semantics = [], scalar_prefetch = 0 : i64, scratch_operands = 0 : i64, tpu.core_type = #tpu.core_type<tc>} {
    %c0 = arith.constant 0 : index
    %c0_0 = arith.constant 0 : index
    %0 = vector.load %arg0[%c0, %c0_0] : memref<64x32xf32, #tpu.memory_space<vmem>>, vector<64x32xf32>
    %c0_1 = arith.constant 0 : index
    %c0_2 = arith.constant 0 : index
    %1 = vector.load %arg7[%c0_1, %c0_2] : memref<64x64xf32, #tpu.memory_space<vmem>>, vector<64x64xf32>
    %c0_3 = arith.constant 0 : index
    %c0_4 = arith.constant 0 : index
    %2 = vector.load %arg1[%c0_3, %c0_4] : memref<32x96xf32, #tpu.memory_space<vmem>>, vector<32x96xf32>
    %cst = arith.constant dense<0.000000e+00> : vector<64x96xf32>
    %3 = tpu.matmul %0, %2, %cst {dimension_numbers = #tpu.dot_dimension_numbers<[1], [0], [0], [1], [0, 0, 1, 1], [], []>} : vector<64x32xf32>, vector<32x96xf32>, vector<64x96xf32> -> vector<64x96xf32>
    %c0_5 = arith.constant 0 : index
    %c0_6 = arith.constant 0 : index
    %4 = vector.load %arg2[%c0_5, %c0_6] : memref<1x96xf32, #tpu.memory_space<vmem>>, vector<1x96xf32>
    %5 = vector.broadcast %4 : vector<1x96xf32> to vector<64x96xf32>
    %6 = arith.addf %3, %5 : vector<64x96xf32>
    %c0_7 = arith.constant 0 : index
    %c0_8 = arith.constant 0 : index
    %7 = vector.load %arg5[%c0_7, %c0_8] : memref<64x96xf32, #tpu.memory_space<vmem>>, vector<64x96xf32>
    %8 = arith.mulf %6, %7 : vector<64x96xf32>
    %c0_9 = arith.constant 0 : index
    %c0_10 = arith.constant 0 : index
    %9 = vector.load %arg6[%c0_9, %c0_10] : memref<96x24xf32, #tpu.memory_space<vmem>>, vector<96x24xf32>
    %cst_11 = arith.constant dense<0.000000e+00> : vector<64x24xf32>
    %10 = tpu.matmul %8, %9, %cst_11 {dimension_numbers = #tpu.dot_dimension_numbers<[1], [0], [0], [1], [0, 0, 1, 1], [], []>} : vector<64x96xf32>, vector<96x24xf32>, vector<64x24xf32> -> vector<64x24xf32>
    %11 = vector.extract_strided_slice %10 {offsets = [0, 0], sizes = [64, 8], strides = [1, 1]} : vector<64x24xf32> to vector<64x8xf32>
    %12 = vector.extract_strided_slice %10 {offsets = [0, 8], sizes = [64, 8], strides = [1, 1]} : vector<64x24xf32> to vector<64x8xf32>
    %13 = vector.extract_strided_slice %10 {offsets = [0, 16], sizes = [64, 8], strides = [1, 1]} : vector<64x24xf32> to vector<64x8xf32>
    %cst_12 = arith.constant dense<0.000000e+00> : vector<64x64xf32>
    %14 = tpu.matmul %11, %12, %cst_12 {dimension_numbers = #tpu.dot_dimension_numbers<[1], [1], [0], [0], [0, 0, 1, 0], [], []>} : vector<64x8xf32>, vector<64x8xf32>, vector<64x64xf32> -> vector<64x64xf32>
    %15 = arith.mulf %14, %1 : vector<64x64xf32>
    %c0_13 = arith.constant 0 : index
    %c0_14 = arith.constant 0 : index
    %16 = vector.load %arg8[%c0_13, %c0_14] : memref<64x8xf32, #tpu.memory_space<vmem>>, vector<64x8xf32>
    %cst_15 = arith.constant dense<0.000000e+00> : vector<64x8xf32>
    %17 = tpu.matmul %15, %16, %cst_15 {dimension_numbers = #tpu.dot_dimension_numbers<[1], [0], [0], [1], [0, 0, 1, 1], [], []>} : vector<64x64xf32>, vector<64x8xf32>, vector<64x8xf32> -> vector<64x8xf32>
    %18 = vector.shape_cast %17 : vector<64x8xf32> to vector<2x4x8x8xf32>
    %cst_16 = arith.constant dense<0xFF800000> : vector<2x8x8xf32>
    %19 = vector.multi_reduction <maximumf>, %18, %cst_16 [1] : vector<2x4x8x8xf32> to vector<2x8x8xf32>
    %20 = vector.shape_cast %19 : vector<2x8x8xf32> to vector<2x1x8x8xf32>
    %21 = vector.broadcast %20 : vector<2x1x8x8xf32> to vector<2x4x8x8xf32>
    %22 = arith.subf %18, %21 : vector<2x4x8x8xf32>
    %23 = math.exp %22 : vector<2x4x8x8xf32>
    %cst_17 = arith.constant dense<0.000000e+00> : vector<2x8x8xf32>
    %24 = vector.multi_reduction <add>, %23, %cst_17 [1] : vector<2x4x8x8xf32> to vector<2x8x8xf32>
    %25 = vector.shape_cast %24 : vector<2x8x8xf32> to vector<2x1x8x8xf32>
    %26 = tpu.reciprocal %25 : vector<2x1x8x8xf32> -> vector<2x1x8x8xf32>
    %27 = vector.broadcast %26 : vector<2x1x8x8xf32> to vector<2x4x8x8xf32>
    %28 = arith.mulf %23, %27 : vector<2x4x8x8xf32>
    %29 = vector.shape_cast %28 : vector<2x4x8x8xf32> to vector<64x8xf32>
    %c0_18 = arith.constant 0 : index
    %c0_19 = arith.constant 0 : index
    %30 = vector.load %arg9[%c0_18, %c0_19] : memref<8x64xf32, #tpu.memory_space<vmem>>, vector<8x64xf32>
    %cst_20 = arith.constant dense<0.000000e+00> : vector<64x64xf32>
    %31 = tpu.matmul %29, %30, %cst_20 {dimension_numbers = #tpu.dot_dimension_numbers<[1], [0], [0], [1], [0, 0, 1, 1], [], []>} : vector<64x8xf32>, vector<8x64xf32>, vector<64x64xf32> -> vector<64x64xf32>
    %32 = arith.mulf %31, %1 : vector<64x64xf32>
    %cst_21 = arith.constant dense<0.000000e+00> : vector<64x8xf32>
    %33 = tpu.matmul %32, %13, %cst_21 {dimension_numbers = #tpu.dot_dimension_numbers<[1], [0], [0], [1], [0, 0, 1, 1], [], []>} : vector<64x64xf32>, vector<64x8xf32>, vector<64x8xf32> -> vector<64x8xf32>
    %c0_22 = arith.constant 0 : index
    %c0_23 = arith.constant 0 : index
    %34 = vector.load %arg10[%c0_22, %c0_23] : memref<8x32xf32, #tpu.memory_space<vmem>>, vector<8x32xf32>
    %cst_24 = arith.constant dense<0.000000e+00> : vector<64x32xf32>
    %35 = tpu.matmul %33, %34, %cst_24 {dimension_numbers = #tpu.dot_dimension_numbers<[1], [0], [0], [1], [0, 0, 1, 1], [], []>} : vector<64x8xf32>, vector<8x32xf32>, vector<64x32xf32> -> vector<64x32xf32>
    %c0_25 = arith.constant 0 : index
    %c0_26 = arith.constant 0 : index
    %36 = vector.load %arg11[%c0_25, %c0_26] : memref<64x32xf32, #tpu.memory_space<vmem>>, vector<64x32xf32>
    %37 = arith.mulf %35, %36 : vector<64x32xf32>
    %c0_27 = arith.constant 0 : index
    %c0_28 = arith.constant 0 : index
    %38 = vector.load %arg12[%c0_27, %c0_28] : memref<16x64xf32, #tpu.memory_space<vmem>>, vector<16x64xf32>
    %cst_29 = arith.constant dense<0.000000e+00> : vector<16x32xf32>
    %39 = tpu.matmul %38, %37, %cst_29 {dimension_numbers = #tpu.dot_dimension_numbers<[1], [0], [0], [1], [0, 0, 1, 1], [], []>} : vector<16x64xf32>, vector<64x32xf32>, vector<16x32xf32> -> vector<16x32xf32>
    %c0_30 = arith.constant 0 : index
    %c0_31 = arith.constant 0 : index
    %40 = vector.load %arg3[%c0_30, %c0_31] : memref<32x32xf32, #tpu.memory_space<vmem>>, vector<32x32xf32>
    %cst_32 = arith.constant dense<0.000000e+00> : vector<16x32xf32>
    %41 = tpu.matmul %39, %40, %cst_32 {dimension_numbers = #tpu.dot_dimension_numbers<[1], [0], [0], [1], [0, 0, 1, 1], [], []>} : vector<16x32xf32>, vector<32x32xf32>, vector<16x32xf32> -> vector<16x32xf32>
    %c0_33 = arith.constant 0 : index
    %c0_34 = arith.constant 0 : index
    %42 = vector.load %arg4[%c0_33, %c0_34] : memref<1x32xf32, #tpu.memory_space<vmem>>, vector<1x32xf32>
    %43 = vector.broadcast %42 : vector<1x32xf32> to vector<16x32xf32>
    %44 = arith.addf %41, %43 : vector<16x32xf32>
    %c0_35 = arith.constant 0 : index
    %c0_36 = arith.constant 0 : index
    %45 = vector.load %arg13[%c0_35, %c0_36] : memref<16x32xf32, #tpu.memory_space<vmem>>, vector<16x32xf32>
    tpu.vector_store %arg13[%c0_35, %c0_36], %44 {strides = array<i32>} : memref<16x32xf32, #tpu.memory_space<vmem>>, vector<16x32xf32>,
    return
  }
}

</mosaic_0001>

<llo_original>
// kernel: multihead_attention.1
$region0: #{multihead_attention.1}
  #allocation0 [shape = 'u32[]', space=smem, size = 0x4, offset = 0x4, fixed_abs, tag = 'smem constant byte address 0x4 - core index']
  #allocation1 [shape = 'u32[144,128]{1,0:T(1,128)}', space=vmem, size = 0x12000, scoped, tag = 'internal scratch']
  %s0 = inlined_call_operand.vmem [shape: f32[64,32], index: 0, kind: input, shape index: {}]
  %s1 = inlined_call_operand.vmem [shape: f32[32,96], index: 1, kind: input, shape index: {}]
  %s2 = inlined_call_operand.vmem [shape: f32[1,96], index: 2, kind: input, shape index: {}]
  %s3 = inlined_call_operand.vmem [shape: f32[32,32], index: 3, kind: input, shape index: {}]
  %s4 = inlined_call_operand.vmem [shape: f32[1,32], index: 4, kind: input, shape index: {}]
  %s5 = inlined_call_operand.vmem [shape: f32[64,96], index: 5, kind: input, shape index: {}]
  %s6 = inlined_call_operand.vmem [shape: f32[96,24], index: 6, kind: input, shape index: {}]
  %s7 = inlined_call_operand.vmem [shape: f32[64,64], index: 7, kind: input, shape index: {}]
  %s8 = inlined_call_operand.vmem [shape: f32[64,8], index: 8, kind: input, shape index: {}]
  %s9 = inlined_call_operand.vmem [shape: f32[8,64], index: 9, kind: input, shape index: {}]
  %s10 = inlined_call_operand.vmem [shape: f32[8,32], index: 10, kind: input, shape index: {}]
  %s11 = inlined_call_operand.vmem [shape: f32[64,32], index: 11, kind: input, shape index: {}]
  %s12 = inlined_call_operand.vmem [shape: f32[16,64], index: 12, kind: input, shape index: {}]
  %s13 = inlined_call_operand.hbm [shape: f32[16,32], index: 13, kind: output, shape index: {}]
  %s14 = sld [smem:[#allocation0]]
  $region62: #{multihead_attention.1} parent=0
    _
  %s16 = ssub.s32 1, %s14
  %s17 = scalar_select 0, %s16, %s14
  $region1: #{multihead_attention.1} parent=0
    #allocation2 [shape = 'u8[8192]{0}', space=vmem, size = 0x2000, scoped, tag = 'output window, operand 0, single buffered']
    #allocation3 [shape = 's32[1]{0}', space=sflag, size = 0x4, scoped, tag = 'scoped memory for multihead_attention.1']
    %18 = vsyncpa [#allocation3], 0
    // Predicated region
    $region2: #{multihead_attention.1} parent=1 // pred_check
      _
    $region3: #{multihead_attention.1} parent=1 // pred_check_branch
      %20 = sbr.rel (0) target = $region5
    $region4: #{multihead_attention.1} parent=1 // pred_region
      _
    $region5: #{multihead_attention.1} parent=1 // pred_fallthru
      _
    // Predicated region
    $region6: #{multihead_attention.1} parent=1 // pred_check
      _
    $region7: #{multihead_attention.1} parent=1 // pred_check_branch
      %22 = sbr.rel (0) target = $region9
    $region8: #{multihead_attention.1} parent=1 // pred_region
      _
    $region9: #{multihead_attention.1} parent=1 // pred_fallthru
      _
    // Predicated region
    $region10: #{multihead_attention.1} parent=1 // pred_check
      _
    $region11: #{multihead_attention.1} parent=1 // pred_check_branch
      %24 = sbr.rel (0) target = $region13
    $region12: #{multihead_attention.1} parent=1 // pred_region
      _
    $region13: #{multihead_attention.1} parent=1 // pred_fallthru
      _
    // Predicated region
    $region14: #{multihead_attention.1} parent=1 // pred_check
      _
    $region15: #{multihead_attention.1} parent=1 // pred_check_branch
      %26 = sbr.rel (0) target = $region17
    $region16: #{multihead_attention.1} parent=1 // pred_region
      _
    $region17: #{multihead_attention.1} parent=1 // pred_fallthru
      _
    // Predicated region
    $region18: #{multihead_attention.1} parent=1 // pred_check
      _
    $region19: #{multihead_attention.1} parent=1 // pred_check_branch
      %28 = sbr.rel (0) target = $region21
    $region20: #{multihead_attention.1} parent=1 // pred_region
      _
    $region21: #{multihead_attention.1} parent=1 // pred_fallthru
      _
    // Predicated region
    $region22: #{multihead_attention.1} parent=1 // pred_check
      _
    $region23: #{multihead_attention.1} parent=1 // pred_check_branch
      %30 = sbr.rel (0) target = $region25
    $region24: #{multihead_attention.1} parent=1 // pred_region
      _
    $region25: #{multihead_attention.1} parent=1 // pred_fallthru
      _
    // Predicated region
    $region26: #{multihead_attention.1} parent=1 // pred_check
      _
    $region27: #{multihead_attention.1} parent=1 // pred_check_branch
      %32 = sbr.rel (0) target = $region29
    $region28: #{multihead_attention.1} parent=1 // pred_region
      _
    $region29: #{multihead_attention.1} parent=1 // pred_fallthru
      _
    // Predicated region
    $region30: #{multihead_attention.1} parent=1 // pred_check
      _
    $region31: #{multihead_attention.1} parent=1 // pred_check_branch
      %34 = sbr.rel (0) target = $region33
    $region32: #{multihead_attention.1} parent=1 // pred_region
      _
    $region33: #{multihead_attention.1} parent=1 // pred_fallthru
      _
    // Predicated region
    $region34: #{multihead_attention.1} parent=1 // pred_check
      _
    $region35: #{multihead_attention.1} parent=1 // pred_check_branch
      %36 = sbr.rel (0) target = $region37
    $region36: #{multihead_attention.1} parent=1 // pred_region
      _
    $region37: #{multihead_attention.1} parent=1 // pred_fallthru
      _
    // Predicated region
    $region38: #{multihead_attention.1} parent=1 // pred_check
      _
    $region39: #{multihead_attention.1} parent=1 // pred_check_branch
      %38 = sbr.rel (0) target = $region41
    $region40: #{multihead_attention.1} parent=1 // pred_region
      _
    $region41: #{multihead_attention.1} parent=1 // pred_fallthru
      _
    // Predicated region
    $region42: #{multihead_attention.1} parent=1 // pred_check
      _
    $region43: #{multihead_attention.1} parent=1 // pred_check_branch
      %40 = sbr.rel (0) target = $region45
    $region44: #{multihead_attention.1} parent=1 // pred_region
      _
    $region45: #{multihead_attention.1} parent=1 // pred_fallthru
      _
    // Predicated region
    $region46: #{multihead_attention.1} parent=1 // pred_check
      _
    $region47: #{multihead_attention.1} parent=1 // pred_check_branch
      %42 = sbr.rel (0) target = $region49
    $region48: #{multihead_attention.1} parent=1 // pred_region
      _
    $region49: #{multihead_attention.1} parent=1 // pred_fallthru
      _
    // Predicated region
    $region50: #{multihead_attention.1} parent=1 // pred_check
      _
    $region51: #{multihead_attention.1} parent=1 // pred_check_branch
      %44 = sbr.rel (0) target = $region53
    $region52: #{multihead_attention.1} parent=1 // pred_region
      _
    $region53: #{multihead_attention.1} parent=1 // pred_fallthru
      _
    %v45 = vld [vmem:[%s0] sm:$0xff]
    %v46 = vld [vmem:[%s0 + $0x8] sm:$0xff]
    %v47 = vld [vmem:[%s0 + $0x10] sm:$0xff]
    %v48 = vld [vmem:[%s0 + $0x18] sm:$0xff]
    %v49 = vld [vmem:[%s0 + $0x20] sm:$0xff]
    %v50 = vld [vmem:[%s0 + $0x28] sm:$0xff]
    %v51 = vld [vmem:[%s0 + $0x30] sm:$0xff]
    %v52 = vld [vmem:[%s0 + $0x38] sm:$0xff]
    %v53 = vld [vmem:[%s7] sm:$0xff]
    %v54 = vld [vmem:[%s7 + $0x8] sm:$0xff]
    %v55 = vld [vmem:[%s7 + $0x10] sm:$0xff]
    %v56 = vld [vmem:[%s7 + $0x18] sm:$0xff]
    %v57 = vld [vmem:[%s7 + $0x20] sm:$0xff]
    %v58 = vld [vmem:[%s7 + $0x28] sm:$0xff]
    %v59 = vld [vmem:[%s7 + $0x30] sm:$0xff]
    %v60 = vld [vmem:[%s7 + $0x38] sm:$0xff]
    %v61 = vld [vmem:[%s1] sm:$0xff]
    %v62 = vld [vmem:[%s1 + $0x8] sm:$0xff]
    %v63 = vld [vmem:[%s1 + $0x10] sm:$0xff]
    %v64 = vld [vmem:[%s1 + $0x18] sm:$0xff]
    %v65 = vld [vmem:[%s2] sm:$0x1]
    %v67 = vlaneseq
    %v68 = vshrl.u32 %v67, 7
    %v69 = vsub.s32 0, %v68
    %v70 = vrot.slane %v65, %v69
    %vm72 = vcmask 261120
    %v74 = vsel %vm72, %v45, 0
    %v77 = vsel %vm72, %v46, 0
    %v80 = vsel %vm72, %v47, 0
    %v83 = vsel %vm72, %v48, 0
    %v86 = vsel %vm72, %v49, 0
    %v89 = vsel %vm72, %v50, 0
    %v92 = vsel %vm72, %v51, 0
    %v95 = vsel %vm72, %v52, 0
    %97 = vmatprep.subr.mxu0 0.0
    %98 = vmatpush1.msra.mxu0 0.0
    %99 = vmatprep.subr.mxu0 0.0
    %100 = vmatpush1.msra.mxu0 0.0
    %101 = vmatprep.subr.mxu0 0.0
    %102 = vmatpush1.msra.mxu0 0.0
    %103 = vmatprep.subr.mxu0 0.0
    %104 = vmatpush1.msra.mxu0 0.0
    %105 = vmatprep.subr.mxu0 0.0
    %106 = vmatpush1.msra.mxu0 0.0
    %107 = vmatprep.subr.mxu0 0.0
    %108 = vmatpush1.msra.mxu0 0.0
    %109 = vmatprep.subr.mxu0 0.0
    %110 = vmatpush1.msra.mxu0 0.0
    %111 = vmatprep.subr.mxu0 0.0
    %112 = vmatpush1.msra.mxu0 0.0
    %113 = vmatprep.subr.mxu0 0.0
    %114 = vmatpush1.msra.mxu0 0.0
    %115 = vmatprep.subr.mxu0 0.0
    %116 = vmatpush1.msra.mxu0 0.0
    %117 = vmatprep.subr.mxu0 0.0
    %118 = vmatpush1.msra.mxu0 0.0
    %119 = vmatprep.subr.mxu0 0.0
    %120 = vmatpush1.msra.mxu0 0.0
    %121 = vmatprep.subr.mxu0 0.0
    %122 = vmatpush1.msra.mxu0 %v64
    %123 = vmatprep.subr.mxu0 0.0
    %124 = vmatpush1.msra.mxu0 %v63
    %125 = vmatprep.subr.mxu0 0.0
    %126 = vmatpush1.msra.mxu0 %v62
    %127 = vmatprep.subr.mxu0 0.0
    %128 = vmatpush1.msra.mxu0 %v61
    %129 = vmatprep.subr.mxu0 0.0
    %130 = vmatpush2.msra.mxu0 0.0
    %131 = vmatprep.subr.mxu0 0.0
    %132 = vmatpush2.msra.mxu0 0.0
    %133 = vmatprep.subr.mxu0 0.0
    %134 = vmatpush2.msra.mxu0 0.0
    %135 = vmatprep.subr.mxu0 0.0
    %136 = vmatpush2.msra.mxu0 0.0
    %137 = vmatprep.subr.mxu0 0.0
    %138 = vmatpush2.msra.mxu0 0.0
    %139 = vmatprep.subr.mxu0 0.0
    %140 = vmatpush2.msra.mxu0 0.0
    %141 = vmatprep.subr.mxu0 0.0
    %142 = vmatpush2.msra.mxu0 0.0
    %143 = vmatprep.subr.mxu0 0.0
    %144 = vmatpush2.msra.mxu0 0.0
    %145 = vmatprep.subr.mxu0 0.0
    %146 = vmatpush2.msra.mxu0 0.0
    %147 = vmatprep.subr.mxu0 0.0
    %148 = vmatpush2.msra.mxu0 0.0
    %149 = vmatprep.subr.mxu0 0.0
    %150 = vmatpush2.msra.mxu0 0.0
    %151 = vmatprep.subr.mxu0 0.0
    %152 = vmatpush2.msra.mxu0 0.0
    %153 = vmatprep.subr.mxu0 0.0
    %154 = vmatpush2.msra.mxu0 0.0
    %155 = vmatprep.subr.mxu0 0.0
    %156 = vmatpush2.msra.mxu0 0.0
    %157 = vmatprep.subr.mxu0 0.0
    %158 = vmatpush2.msra.mxu0 0.0
    %159 = vmatprep.subr.mxu0 0.0
    %160 = vmatpush2.msra.mxu0 0.0
    %161 = vmatprep.mubr.f32.mxu0 0.0
    %162 = vmatmul.mubr.f32.gmra.mxu0 %v74
    %v163 = vpop.f32.mrf.mxu0
    %v164 = vadd.f32 %v70, %v163
    %v165 = vpop.f32.mrf.mxu0
    %166 = vmatprep.mubr.f32.mxu0 0.0
    %167 = vmatmul.mubr.f32.gmra.mxu0 %v77
    %v168 = vpop.f32.mrf.mxu0
    %v169 = vadd.f32 %v70, %v168
    %v170 = vpop.f32.mrf.mxu0
    %171 = vmatprep.mubr.f32.mxu0 0.0
    %172 = vmatmul.mubr.f32.gmra.mxu0 %v80
    %v173 = vpop.f32.mrf.mxu0
    %v174 = vadd.f32 %v70, %v173
    %v175 = vpop.f32.mrf.mxu0
    %176 = vmatprep.mubr.f32.mxu0 0.0
    %177 = vmatmul.mubr.f32.gmra.mxu0 %v83
    %v178 = vpop.f32.mrf.mxu0
    %v179 = vadd.f32 %v70, %v178
    %v180 = vpop.f32.mrf.mxu0
    %181 = vmatprep.mubr.f32.mxu0 0.0
    %182 = vmatmul.mubr.f32.gmra.mxu0 %v86
    %v183 = vpop.f32.mrf.mxu0
    %v184 = vadd.f32 %v70, %v183
    %v185 = vpop.f32.mrf.mxu0
    %186 = vmatprep.mubr.f32.mxu0 0.0
    %187 = vmatmul.mubr.f32.gmra.mxu0 %v89
    %v188 = vpop.f32.mrf.mxu0
    %v189 = vadd.f32 %v70, %v188
    %v190 = vpop.f32.mrf.mxu0
    %191 = vmatprep.mubr.f32.mxu0 0.0
    %192 = vmatmul.mubr.f32.gmra.mxu0 %v92
    %v193 = vpop.f32.mrf.mxu0
    %v194 = vadd.f32 %v70, %v193
    %v195 = vpop.f32.mrf.mxu0
    %196 = vmatprep.mubr.f32.mxu0 0.0
    %197 = vmatmul.mubr.f32.gmra.mxu0 %v95
    %v198 = vpop.f32.mrf.mxu0
    %v199 = vadd.f32 %v70, %v198
    %v200 = vpop.f32.mrf.mxu0
    %201 = vdwg.mxu0
    %v202 = vld [vmem:[%s5] sm:$0xff]
    %v203 = vld [vmem:[%s5 + $0x8] sm:$0xff]
    %v204 = vld [vmem:[%s5 + $0x10] sm:$0xff]
    %v205 = vld [vmem:[%s5 + $0x18] sm:$0xff]
    %v206 = vld [vmem:[%s5 + $0x20] sm:$0xff]
    %v207 = vld [vmem:[%s5 + $0x28] sm:$0xff]
    %v208 = vld [vmem:[%s5 + $0x30] sm:$0xff]
    %v209 = vld [vmem:[%s5 + $0x38] sm:$0xff]
    %v210 = vmul.f32 %v164, %v202
    %v211 = vmul.f32 %v169, %v203
    %v212 = vmul.f32 %v174, %v204
    %v213 = vmul.f32 %v179, %v205
    %v214 = vmul.f32 %v184, %v206
    %v215 = vmul.f32 %v189, %v207
    %v216 = vmul.f32 %v194, %v208
    %v217 = vmul.f32 %v199, %v209
    %v218 = vld [vmem:[%s6] sm:$0xff]
    %v219 = vld [vmem:[%s6 + $0x8] sm:$0xff]
    %v220 = vld [vmem:[%s6 + $0x10] sm:$0xff]
    %v221 = vld [vmem:[%s6 + $0x18] sm:$0xff]
    %v222 = vld [vmem:[%s6 + $0x20] sm:$0xff]
    %v223 = vld [vmem:[%s6 + $0x28] sm:$0xff]
    %v224 = vld [vmem:[%s6 + $0x30] sm:$0xff]
    %v225 = vld [vmem:[%s6 + $0x38] sm:$0xff]
    %v226 = vld [vmem:[%s6 + $0x40] sm:$0xff]
    %v227 = vld [vmem:[%s6 + $0x48] sm:$0xff]
    %v228 = vld [vmem:[%s6 + $0x50] sm:$0xff]
    %v229 = vld [vmem:[%s6 + $0x58] sm:$0xff]
    %vm230 = vcmask 785408
    %v232 = vsel %vm230, %v210, 0
    %v235 = vsel %vm230, %v211, 0
    %v238 = vsel %vm230, %v212, 0
    %v241 = vsel %vm230, %v213, 0
    %v244 = vsel %vm230, %v214, 0
    %v247 = vsel %vm230, %v215, 0
    %v250 = vsel %vm230, %v216, 0
    %v253 = vsel %vm230, %v217, 0
    %255 = vmatprep.subr.mxu0 0.0
    %256 = vmatpush1.msra.mxu0 0.0
    %257 = vmatprep.subr.mxu0 0.0
    %258 = vmatpush1.msra.mxu0 0.0
    %259 = vmatprep.subr.mxu0 0.0
    %260 = vmatpush1.msra.mxu0 0.0
    %261 = vmatprep.subr.mxu0 0.0
    %262 = vmatpush1.msra.mxu0 0.0
    %263 = vmatprep.subr.mxu0 0.0
    %264 = vmatpush1.msra.mxu0 %v229
    %265 = vmatprep.subr.mxu0 0.0
    %266 = vmatpush1.msra.mxu0 %v228
    %267 = vmatprep.subr.mxu0 0.0
    %268 = vmatpush1.msra.mxu0 %v227
    %269 = vmatprep.subr.mxu0 0.0
    %270 = vmatpush1.msra.mxu0 %v226
    %271 = vmatprep.subr.mxu0 0.0
    %272 = vmatpush1.msra.mxu0 %v225
    %273 = vmatprep.subr.mxu0 0.0
    %274 = vmatpush1.msra.mxu0 %v224
    %275 = vmatprep.subr.mxu0 0.0
    %276 = vmatpush1.msra.mxu0 %v223
    %277 = vmatprep.subr.mxu0 0.0
    %278 = vmatpush1.msra.mxu0 %v222
    %279 = vmatprep.subr.mxu0 0.0
    %280 = vmatpush1.msra.mxu0 %v221
    %281 = vmatprep.subr.mxu0 0.0
    %282 = vmatpush1.msra.mxu0 %v220
    %283 = vmatprep.subr.mxu0 0.0
    %284 = vmatpush1.msra.mxu0 %v219
    %285 = vmatprep.subr.mxu0 0.0
    %286 = vmatpush1.msra.mxu0 %v218
    %287 = vmatprep.subr.mxu0 0.0
    %288 = vmatpush2.msra.mxu0 0.0
    %289 = vmatprep.subr.mxu0 0.0
    %290 = vmatpush2.msra.mxu0 0.0
    %291 = vmatprep.subr.mxu0 0.0
    %292 = vmatpush2.msra.mxu0 0.0
    %293 = vmatprep.subr.mxu0 0.0
    %294 = vmatpush2.msra.mxu0 0.0
    %295 = vmatprep.subr.mxu0 0.0
    %296 = vmatpush2.msra.mxu0 0.0
    %297 = vmatprep.subr.mxu0 0.0
    %298 = vmatpush2.msra.mxu0 0.0
    %299 = vmatprep.subr.mxu0 0.0
    %300 = vmatpush2.msra.mxu0 0.0
    %301 = vmatprep.subr.mxu0 0.0
    %302 = vmatpush2.msra.mxu0 0.0
    %303 = vmatprep.subr.mxu0 0.0
    %304 = vmatpush2.msra.mxu0 0.0
    %305 = vmatprep.subr.mxu0 0.0
    %306 = vmatpush2.msra.mxu0 0.0
    %307 = vmatprep.subr.mxu0 0.0
    %308 = vmatpush2.msra.mxu0 0.0
    %309 = vmatprep.subr.mxu0 0.0
    %310 = vmatpush2.msra.mxu0 0.0
    %311 = vmatprep.subr.mxu0 0.0
    %312 = vmatpush2.msra.mxu0 0.0
    %313 = vmatprep.subr.mxu0 0.0
    %314 = vmatpush2.msra.mxu0 0.0
    %315 = vmatprep.subr.mxu0 0.0
    %316 = vmatpush2.msra.mxu0 0.0
    %317 = vmatprep.subr.mxu0 0.0
    %318 = vmatpush2.msra.mxu0 0.0
    %319 = vmatprep.mubr.f32.mxu0 0.0
    %320 = vmatmul.mubr.f32.gmra.mxu0 %v232
    %v321 = vpop.f32.mrf.mxu0
    %v322 = vadd.f32 0.0, %v321
    %v323 = vpop.f32.mrf.mxu0
    %324 = vmatprep.mubr.f32.mxu0 0.0
    %325 = vmatmul.mubr.f32.gmra.mxu0 %v235
    %v326 = vpop.f32.mrf.mxu0
    %v327 = vadd.f32 0.0, %v326
    %v328 = vpop.f32.mrf.mxu0
    %329 = vmatprep.mubr.f32.mxu0 0.0
    %330 = vmatmul.mubr.f32.gmra.mxu0 %v238
    %v331 = vpop.f32.mrf.mxu0
    %v332 = vadd.f32 0.0, %v331
    %v333 = vpop.f32.mrf.mxu0
    %334 = vmatprep.mubr.f32.mxu0 0.0
    %335 = vmatmul.mubr.f32.gmra.mxu0 %v241
    %v336 = vpop.f32.mrf.mxu0
    %v337 = vadd.f32 0.0, %v336
    %v338 = vpop.f32.mrf.mxu0
    %339 = vmatprep.mubr.f32.mxu0 0.0
    %340 = vmatmul.mubr.f32.gmra.mxu0 %v244
    %v341 = vpop.f32.mrf.mxu0
    %v342 = vadd.f32 0.0, %v341
    %v343 = vpop.f32.mrf.mxu0
    %344 = vmatprep.mubr.f32.mxu0 0.0
    %345 = vmatmul.mubr.f32.gmra.mxu0 %v247
    %v346 = vpop.f32.mrf.mxu0
    %v347 = vadd.f32 0.0, %v346
    %v348 = vpop.f32.mrf.mxu0
    %349 = vmatprep.mubr.f32.mxu0 0.0
    %350 = vmatmul.mubr.f32.gmra.mxu0 %v250
    %v351 = vpop.f32.mrf.mxu0
    %v352 = vadd.f32 0.0, %v351
    %v353 = vpop.f32.mrf.mxu0
    %354 = vmatprep.mubr.f32.mxu0 0.0
    %355 = vmatmul.mubr.f32.gmra.mxu0 %v253
    %v356 = vpop.f32.mrf.mxu0
    %v357 = vadd.f32 0.0, %v356
    %v358 = vpop.f32.mrf.mxu0
    %359 = vdwg.mxu0
    %368 = vrot.lane.b32.xlu0 %v322, 120
    %v369 = vpop.permute.xlu0 %368
    %370 = vrot.lane.b32.xlu0 %v327, 120
    %v371 = vpop.permute.xlu0 %370
    %372 = vrot.lane.b32.xlu0 %v332, 120
    %v373 = vpop.permute.xlu0 %372
    %374 = vrot.lane.b32.xlu0 %v337, 120
    %v375 = vpop.permute.xlu0 %374
    %376 = vrot.lane.b32.xlu0 %v342, 120
    %v377 = vpop.permute.xlu0 %376
    %378 = vrot.lane.b32.xlu0 %v347, 120
    %v379 = vpop.permute.xlu0 %378
    %380 = vrot.lane.b32.xlu0 %v352, 120
    %v381 = vpop.permute.xlu0 %380
    %382 = vrot.lane.b32.xlu0 %v357, 120
    %v383 = vpop.permute.xlu0 %382
    %vm384 = vcmask 64512
    %v385 = vsel %vm384, %v322, 0
    %v387 = vsel %vm384, %v327, 0
    %v389 = vsel %vm384, %v332, 0
    %v391 = vsel %vm384, %v337, 0
    %v393 = vsel %vm384, %v342, 0
    %v395 = vsel %vm384, %v347, 0
    %v397 = vsel %vm384, %v352, 0
    %v399 = vsel %vm384, %v357, 0
    %v401 = vsel %vm384, %v369, 0
    %v403 = vsel %vm384, %v371, 0
    %v405 = vsel %vm384, %v373, 0
    %v407 = vsel %vm384, %v375, 0
    %v409 = vsel %vm384, %v377, 0
    %v411 = vsel %vm384, %v379, 0
    %v413 = vsel %vm384, %v381, 0
    %v415 = vsel %vm384, %v383, 0
    %417 = vmatprep.subr.mxu0 0.0
    %418 = vmatpush1.xpose.msra.mxu0 0.0
    %419 = vmatprep.subr.mxu0 0.0
    %420 = vmatpush1.xpose.msra.mxu0 0.0
    %421 = vmatprep.subr.mxu0 0.0
    %422 = vmatpush1.xpose.msra.mxu0 0.0
    %423 = vmatprep.subr.mxu0 0.0
    %424 = vmatpush1.xpose.msra.mxu0 0.0
    %425 = vmatprep.subr.mxu0 0.0
    %426 = vmatpush1.xpose.msra.mxu0 0.0
    %427 = vmatprep.subr.mxu0 0.0
    %428 = vmatpush1.xpose.msra.mxu0 0.0
    %429 = vmatprep.subr.mxu0 0.0
    %430 = vmatpush1.xpose.msra.mxu0 0.0
    %431 = vmatprep.subr.mxu0 0.0
    %432 = vmatpush1.xpose.msra.mxu0 0.0
    %433 = vmatprep.subr.mxu0 0.0
    %434 = vmatpush1.xpose.msra.mxu0 %v415
    %435 = vmatprep.subr.mxu0 0.0
    %436 = vmatpush1.xpose.msra.mxu0 %v413
    %437 = vmatprep.subr.mxu0 0.0
    %438 = vmatpush1.xpose.msra.mxu0 %v411
    %439 = vmatprep.subr.mxu0 0.0
    %440 = vmatpush1.xpose.msra.mxu0 %v409
    %441 = vmatprep.subr.mxu0 0.0
    %442 = vmatpush1.xpose.msra.mxu0 %v407
    %443 = vmatprep.subr.mxu0 0.0
    %444 = vmatpush1.xpose.msra.mxu0 %v405
    %445 = vmatprep.subr.mxu0 0.0
    %446 = vmatpush1.xpose.msra.mxu0 %v403
    %447 = vmatprep.subr.mxu0 0.0
    %448 = vmatpush1.xpose.msra.mxu0 %v401
    %449 = vmatprep.subr.mxu0 0.0
    %450 = vmatpush2.xpose.msra.mxu0 0.0
    %451 = vmatprep.subr.mxu0 0.0
    %452 = vmatpush2.xpose.msra.mxu0 0.0
    %453 = vmatprep.subr.mxu0 0.0
    %454 = vmatpush2.xpose.msra.mxu0 0.0
    %455 = vmatprep.subr.mxu0 0.0
    %456 = vmatpush2.xpose.msra.mxu0 0.0
    %457 = vmatprep.subr.mxu0 0.0
    %458 = vmatpush2.xpose.msra.mxu0 0.0
    %459 = vmatprep.subr.mxu0 0.0
    %460 = vmatpush2.xpose.msra.mxu0 0.0
    %461 = vmatprep.subr.mxu0 0.0
    %462 = vmatpush2.xpose.msra.mxu0 0.0
    %463 = vmatprep.subr.mxu0 0.0
    %464 = vmatpush2.xpose.msra.mxu0 0.0
    %465 = vmatprep.subr.mxu0 0.0
    %466 = vmatpush2.xpose.msra.mxu0 0.0
    %467 = vmatprep.subr.mxu0 0.0
    %468 = vmatpush2.xpose.msra.mxu0 0.0
    %469 = vmatprep.subr.mxu0 0.0
    %470 = vmatpush2.xpose.msra.mxu0 0.0
    %471 = vmatprep.subr.mxu0 0.0
    %472 = vmatpush2.xpose.msra.mxu0 0.0
    %473 = vmatprep.subr.mxu0 0.0
    %474 = vmatpush2.xpose.msra.mxu0 0.0
    %475 = vmatprep.subr.mxu0 0.0
    %476 = vmatpush2.xpose.msra.mxu0 0.0
    %477 = vmatprep.subr.mxu0 0.0
    %478 = vmatpush2.xpose.msra.mxu0 0.0
    %479 = vmatprep.subr.mxu0 0.0
    %480 = vmatpush2.xpose.msra.mxu0 0.0
    %481 = vmatprep.mubr.f32.mxu0 0.0
    %482 = vmatmul.mubr.f32.gmra.mxu0 %v385
    %v483 = vpop.f32.mrf.mxu0
    %v484 = vadd.f32 0.0, %v483
    %v485 = vpop.f32.mrf.mxu0
    %486 = vmatprep.mubr.f32.mxu0 0.0
    %487 = vmatmul.mubr.f32.gmra.mxu0 %v387
    %v488 = vpop.f32.mrf.mxu0
    %v489 = vadd.f32 0.0, %v488
    %v490 = vpop.f32.mrf.mxu0
    %491 = vmatprep.mubr.f32.mxu0 0.0
    %492 = vmatmul.mubr.f32.gmra.mxu0 %v389
    %v493 = vpop.f32.mrf.mxu0
    %v494 = vadd.f32 0.0, %v493
    %v495 = vpop.f32.mrf.mxu0
    %496 = vmatprep.mubr.f32.mxu0 0.0
    %497 = vmatmul.mubr.f32.gmra.mxu0 %v391
    %v498 = vpop.f32.mrf.mxu0
    %v499 = vadd.f32 0.0, %v498
    %v500 = vpop.f32.mrf.mxu0
    %501 = vmatprep.mubr.f32.mxu0 0.0
    %502 = vmatmul.mubr.f32.gmra.mxu0 %v393
    %v503 = vpop.f32.mrf.mxu0
    %v504 = vadd.f32 0.0, %v503
    %v505 = vpop.f32.mrf.mxu0
    %506 = vmatprep.mubr.f32.mxu0 0.0
    %507 = vmatmul.mubr.f32.gmra.mxu0 %v395
    %v508 = vpop.f32.mrf.mxu0
    %v509 = vadd.f32 0.0, %v508
    %v510 = vpop.f32.mrf.mxu0
    %511 = vmatprep.mubr.f32.mxu0 0.0
    %512 = vmatmul.mubr.f32.gmra.mxu0 %v397
    %v513 = vpop.f32.mrf.mxu0
    %v514 = vadd.f32 0.0, %v513
    %v515 = vpop.f32.mrf.mxu0
    %516 = vmatprep.mubr.f32.mxu0 0.0
    %517 = vmatmul.mubr.f32.gmra.mxu0 %v399
    %v518 = vpop.f32.mrf.mxu0
    %v519 = vadd.f32 0.0, %v518
    %v520 = vpop.f32.mrf.mxu0
    %521 = vdwg.mxu0
    %v522 = vmul.f32 %v484, %v53
    %v523 = vmul.f32 %v489, %v54
    %v524 = vmul.f32 %v494, %v55
    %v525 = vmul.f32 %v499, %v56
    %v526 = vmul.f32 %v504, %v57
    %v527 = vmul.f32 %v509, %v58
    %v528 = vmul.f32 %v514, %v59
    %v529 = vmul.f32 %v519, %v60
    %v530 = vld [vmem:[%s8] sm:$0xff]
    %v531 = vld [vmem:[%s8 + $0x8] sm:$0xff]
    %v532 = vld [vmem:[%s8 + $0x10] sm:$0xff]
    %v533 = vld [vmem:[%s8 + $0x18] sm:$0xff]
    %v534 = vld [vmem:[%s8 + $0x20] sm:$0xff]
    %v535 = vld [vmem:[%s8 + $0x28] sm:$0xff]
    %v536 = vld [vmem:[%s8 + $0x30] sm:$0xff]
    %v537 = vld [vmem:[%s8 + $0x38] sm:$0xff]
    %vm538 = vcmask 523264
    %v540 = vsel %vm538, %v522, 0
    %v543 = vsel %vm538, %v523, 0
    %v546 = vsel %vm538, %v524, 0
    %v549 = vsel %vm538, %v525, 0
    %v552 = vsel %vm538, %v526, 0
    %v555 = vsel %vm538, %v527, 0
    %v558 = vsel %vm538, %v528, 0
    %v561 = vsel %vm538, %v529, 0
    %563 = vmatprep.subr.mxu0 0.0
    %564 = vmatpush1.msra.mxu0 0.0
    %565 = vmatprep.subr.mxu0 0.0
    %566 = vmatpush1.msra.mxu0 0.0
    %567 = vmatprep.subr.mxu0 0.0
    %568 = vmatpush1.msra.mxu0 0.0
    %569 = vmatprep.subr.mxu0 0.0
    %570 = vmatpush1.msra.mxu0 0.0
    %571 = vmatprep.subr.mxu0 0.0
    %572 = vmatpush1.msra.mxu0 0.0
    %573 = vmatprep.subr.mxu0 0.0
    %574 = vmatpush1.msra.mxu0 0.0
    %575 = vmatprep.subr.mxu0 0.0
    %576 = vmatpush1.msra.mxu0 0.0
    %577 = vmatprep.subr.mxu0 0.0
    %578 = vmatpush1.msra.mxu0 0.0
    %579 = vmatprep.subr.mxu0 0.0
    %580 = vmatpush1.msra.mxu0 %v537
    %581 = vmatprep.subr.mxu0 0.0
    %582 = vmatpush1.msra.mxu0 %v536
    %583 = vmatprep.subr.mxu0 0.0
    %584 = vmatpush1.msra.mxu0 %v535
    %585 = vmatprep.subr.mxu0 0.0
    %586 = vmatpush1.msra.mxu0 %v534
    %587 = vmatprep.subr.mxu0 0.0
    %588 = vmatpush1.msra.mxu0 %v533
    %589 = vmatprep.subr.mxu0 0.0
    %590 = vmatpush1.msra.mxu0 %v532
    %591 = vmatprep.subr.mxu0 0.0
    %592 = vmatpush1.msra.mxu0 %v531
    %593 = vmatprep.subr.mxu0 0.0
    %594 = vmatpush1.msra.mxu0 %v530
    %595 = vmatprep.subr.mxu0 0.0
    %596 = vmatpush2.msra.mxu0 0.0
    %597 = vmatprep.subr.mxu0 0.0
    %598 = vmatpush2.msra.mxu0 0.0
    %599 = vmatprep.subr.mxu0 0.0
    %600 = vmatpush2.msra.mxu0 0.0
    %601 = vmatprep.subr.mxu0 0.0
    %602 = vmatpush2.msra.mxu0 0.0
    %603 = vmatprep.subr.mxu0 0.0
    %604 = vmatpush2.msra.mxu0 0.0
    %605 = vmatprep.subr.mxu0 0.0
    %606 = vmatpush2.msra.mxu0 0.0
    %607 = vmatprep.subr.mxu0 0.0
    %608 = vmatpush2.msra.mxu0 0.0
    %609 = vmatprep.subr.mxu0 0.0
    %610 = vmatpush2.msra.mxu0 0.0
    %611 = vmatprep.subr.mxu0 0.0
    %612 = vmatpush2.msra.mxu0 0.0
    %613 = vmatprep.subr.mxu0 0.0
    %614 = vmatpush2.msra.mxu0 0.0
    %615 = vmatprep.subr.mxu0 0.0
    %616 = vmatpush2.msra.mxu0 0.0
    %617 = vmatprep.subr.mxu0 0.0
    %618 = vmatpush2.msra.mxu0 0.0
    %619 = vmatprep.subr.mxu0 0.0
    %620 = vmatpush2.msra.mxu0 0.0
    %621 = vmatprep.subr.mxu0 0.0
    %622 = vmatpush2.msra.mxu0 0.0
    %623 = vmatprep.subr.mxu0 0.0
    %624 = vmatpush2.msra.mxu0 0.0
    %625 = vmatprep.subr.mxu0 0.0
    %626 = vmatpush2.msra.mxu0 0.0
    %627 = vmatprep.mubr.f32.mxu0 0.0
    %628 = vmatmul.mubr.f32.gmra.mxu0 %v540
    %v629 = vpop.f32.mrf.mxu0
    %v630 = vadd.f32 0.0, %v629
    %v631 = vpop.f32.mrf.mxu0
    %632 = vmatprep.mubr.f32.mxu0 0.0
    %633 = vmatmul.mubr.f32.gmra.mxu0 %v543
    %v634 = vpop.f32.mrf.mxu0
    %v635 = vadd.f32 0.0, %v634
    %v636 = vpop.f32.mrf.mxu0
    %637 = vmatprep.mubr.f32.mxu0 0.0
    %638 = vmatmul.mubr.f32.gmra.mxu0 %v546
    %v639 = vpop.f32.mrf.mxu0
    %v640 = vadd.f32 0.0, %v639
    %v641 = vpop.f32.mrf.mxu0
    %642 = vmatprep.mubr.f32.mxu0 0.0
    %643 = vmatmul.mubr.f32.gmra.mxu0 %v549
    %v644 = vpop.f32.mrf.mxu0
    %v645 = vadd.f32 0.0, %v644
    %v646 = vpop.f32.mrf.mxu0
    %647 = vmatprep.mubr.f32.mxu0 0.0
    %648 = vmatmul.mubr.f32.gmra.mxu0 %v552
    %v649 = vpop.f32.mrf.mxu0
    %v650 = vadd.f32 0.0, %v649
    %v651 = vpop.f32.mrf.mxu0
    %652 = vmatprep.mubr.f32.mxu0 0.0
    %653 = vmatmul.mubr.f32.gmra.mxu0 %v555
    %v654 = vpop.f32.mrf.mxu0
    %v655 = vadd.f32 0.0, %v654
    %v656 = vpop.f32.mrf.mxu0
    %657 = vmatprep.mubr.f32.mxu0 0.0
    %658 = vmatmul.mubr.f32.gmra.mxu0 %v558
    %v659 = vpop.f32.mrf.mxu0
    %v660 = vadd.f32 0.0, %v659
    %v661 = vpop.f32.mrf.mxu0
    %662 = vmatprep.mubr.f32.mxu0 0.0
    %663 = vmatmul.mubr.f32.gmra.mxu0 %v561
    %v664 = vpop.f32.mrf.mxu0
    %v665 = vadd.f32 0.0, %v664
    %v666 = vpop.f32.mrf.mxu0
    %667 = vdwg.mxu0
    %v668 = vsel %vm384, %v630, -inf
    %v669 = vsel %vm384, %v635, -inf
    %v670 = vsel %vm384, %v640, -inf
    %v671 = vmax.f32 %v668, %v670
    %v672 = vsel %vm384, %v645, -inf
    %v673 = vmax.f32 %v669, %v672
    %v674 = vmax.f32 %v671, %v673
    %v675 = vsel %vm384, %v650, -inf
    %v676 = vsel %vm384, %v655, -inf
    %v677 = vsel %vm384, %v660, -inf
    %v678 = vmax.f32 %v675, %v677
    %v679 = vsel %vm384, %v665, -inf
    %v680 = vmax.f32 %v676, %v679
    %v681 = vmax.f32 %v678, %v680
    %v682 = vsub.f32 %v630, %v674
    %v683 = vsub.f32 %v635, %v674
    %v684 = vsub.f32 %v640, %v674
    %v685 = vsub.f32 %v645, %v674
    %v686 = vsub.f32 %v650, %v681
    %v687 = vsub.f32 %v655, %v681
    %v688 = vsub.f32 %v660, %v681
    %v689 = vsub.f32 %v665, %v681
    %v690 = vmul.f32 %v682, 1.442695
    %v691 = vpow.pop %v690
    %v692 = vmul.f32 %v683, 1.442695
    %v693 = vpow.pop %v692
    %v694 = vmul.f32 %v684, 1.442695
    %v695 = vpow.pop %v694
    %v696 = vmul.f32 %v685, 1.442695
    %v697 = vpow.pop %v696
    %v698 = vmul.f32 %v686, 1.442695
    %v699 = vpow.pop %v698
    %v700 = vmul.f32 %v687, 1.442695
    %v701 = vpow.pop %v700
    %v702 = vmul.f32 %v688, 1.442695
    %v703 = vpow.pop %v702
    %v704 = vmul.f32 %v689, 1.442695
    %v705 = vpow.pop %v704
    %v706 = vsel %vm384, %v691, 0.0
    %v707 = vsel %vm384, %v693, 0.0
    %v708 = vadd.f32 %v706, %v707
    %v709 = vsel %vm384, %v695, 0.0
    %v710 = vadd.f32 %v708, %v709
    %v711 = vsel %vm384, %v697, 0.0
    %v712 = vadd.f32 %v710, %v711
    %v713 = vsel %vm384, %v699, 0.0
    %v714 = vsel %vm384, %v701, 0.0
    %v715 = vadd.f32 %v713, %v714
    %v716 = vsel %vm384, %v703, 0.0
    %v717 = vadd.f32 %v715, %v716
    %v718 = vsel %vm384, %v705, 0.0
    %v719 = vadd.f32 %v717, %v718
    %v720 = vrcp.pop %v712
    %v721 = vrcp.pop %v719
    %v722 = vmul.f32 %v691, %v720
    %v723 = vmul.f32 %v693, %v720
    %v724 = vmul.f32 %v695, %v720
    %v725 = vmul.f32 %v697, %v720
    %v726 = vmul.f32 %v699, %v721
    %v727 = vmul.f32 %v701, %v721
    %v728 = vmul.f32 %v703, %v721
    %v729 = vmul.f32 %v705, %v721
    %v730 = vld [vmem:[%s9] sm:$0xff]
    %v732 = vsel %vm384, %v722, 0
    %v735 = vsel %vm384, %v723, 0
    %v738 = vsel %vm384, %v724, 0
    %v741 = vsel %vm384, %v725, 0
    %v744 = vsel %vm384, %v726, 0
    %v747 = vsel %vm384, %v727, 0
    %v750 = vsel %vm384, %v728, 0
    %v753 = vsel %vm384, %v729, 0
    %755 = vmatprep.subr.mxu0 0.0
    %756 = vmatpush1.msra.mxu0 0.0
    %757 = vmatprep.subr.mxu0 0.0
    %758 = vmatpush1.msra.mxu0 0.0
    %759 = vmatprep.subr.mxu0 0.0
    %760 = vmatpush1.msra.mxu0 0.0
    %761 = vmatprep.subr.mxu0 0.0
    %762 = vmatpush1.msra.mxu0 0.0
    %763 = vmatprep.subr.mxu0 0.0
    %764 = vmatpush1.msra.mxu0 0.0
    %765 = vmatprep.subr.mxu0 0.0
    %766 = vmatpush1.msra.mxu0 0.0
    %767 = vmatprep.subr.mxu0 0.0
    %768 = vmatpush1.msra.mxu0 0.0
    %769 = vmatprep.subr.mxu0 0.0
    %770 = vmatpush1.msra.mxu0 0.0
    %771 = vmatprep.subr.mxu0 0.0
    %772 = vmatpush1.msra.mxu0 0.0
    %773 = vmatprep.subr.mxu0 0.0
    %774 = vmatpush1.msra.mxu0 0.0
    %775 = vmatprep.subr.mxu0 0.0
    %776 = vmatpush1.msra.mxu0 0.0
    %777 = vmatprep.subr.mxu0 0.0
    %778 = vmatpush1.msra.mxu0 0.0
    %779 = vmatprep.subr.mxu0 0.0
    %780 = vmatpush1.msra.mxu0 0.0
    %781 = vmatprep.subr.mxu0 0.0
    %782 = vmatpush1.msra.mxu0 0.0
    %783 = vmatprep.subr.mxu0 0.0
    %784 = vmatpush1.msra.mxu0 0.0
    %785 = vmatprep.subr.mxu0 0.0
    %786 = vmatpush1.msra.mxu0 %v730
    %787 = vmatprep.subr.mxu0 0.0
    %788 = vmatpush2.msra.mxu0 0.0
    %789 = vmatprep.subr.mxu0 0.0
    %790 = vmatpush2.msra.mxu0 0.0
    %791 = vmatprep.subr.mxu0 0.0
    %792 = vmatpush2.msra.mxu0 0.0
    %793 = vmatprep.subr.mxu0 0.0
    %794 = vmatpush2.msra.mxu0 0.0
    %795 = vmatprep.subr.mxu0 0.0
    %796 = vmatpush2.msra.mxu0 0.0
    %797 = vmatprep.subr.mxu0 0.0
    %798 = vmatpush2.msra.mxu0 0.0
    %799 = vmatprep.subr.mxu0 0.0
    %800 = vmatpush2.msra.mxu0 0.0
    %801 = vmatprep.subr.mxu0 0.0
    %802 = vmatpush2.msra.mxu0 0.0
    %803 = vmatprep.subr.mxu0 0.0
    %804 = vmatpush2.msra.mxu0 0.0
    %805 = vmatprep.subr.mxu0 0.0
    %806 = vmatpush2.msra.mxu0 0.0
    %807 = vmatprep.subr.mxu0 0.0
    %808 = vmatpush2.msra.mxu0 0.0
    %809 = vmatprep.subr.mxu0 0.0
    %810 = vmatpush2.msra.mxu0 0.0
    %811 = vmatprep.subr.mxu0 0.0
    %812 = vmatpush2.msra.mxu0 0.0
    %813 = vmatprep.subr.mxu0 0.0
    %814 = vmatpush2.msra.mxu0 0.0
    %815 = vmatprep.subr.mxu0 0.0
    %816 = vmatpush2.msra.mxu0 0.0
    %817 = vmatprep.subr.mxu0 0.0
    %818 = vmatpush2.msra.mxu0 0.0
    %819 = vmatprep.mubr.f32.mxu0 0.0
    %820 = vmatmul.mubr.f32.gmra.mxu0 %v732
    %v821 = vpop.f32.mrf.mxu0
    %v822 = vadd.f32 0.0, %v821
    %v823 = vpop.f32.mrf.mxu0
    %824 = vmatprep.mubr.f32.mxu0 0.0
    %825 = vmatmul.mubr.f32.gmra.mxu0 %v735
    %v826 = vpop.f32.mrf.mxu0
    %v827 = vadd.f32 0.0, %v826
    %v828 = vpop.f32.mrf.mxu0
    %829 = vmatprep.mubr.f32.mxu0 0.0
    %830 = vmatmul.mubr.f32.gmra.mxu0 %v738
    %v831 = vpop.f32.mrf.mxu0
    %v832 = vadd.f32 0.0, %v831
    %v833 = vpop.f32.mrf.mxu0
    %834 = vmatprep.mubr.f32.mxu0 0.0
    %835 = vmatmul.mubr.f32.gmra.mxu0 %v741
    %v836 = vpop.f32.mrf.mxu0
    %v837 = vadd.f32 0.0, %v836
    %v838 = vpop.f32.mrf.mxu0
    %839 = vmatprep.mubr.f32.mxu0 0.0
    %840 = vmatmul.mubr.f32.gmra.mxu0 %v744
    %v841 = vpop.f32.mrf.mxu0
    %v842 = vadd.f32 0.0, %v841
    %v843 = vpop.f32.mrf.mxu0
    %844 = vmatprep.mubr.f32.mxu0 0.0
    %845 = vmatmul.mubr.f32.gmra.mxu0 %v747
    %v846 = vpop.f32.mrf.mxu0
    %v847 = vadd.f32 0.0, %v846
    %v848 = vpop.f32.mrf.mxu0
    %849 = vmatprep.mubr.f32.mxu0 0.0
    %850 = vmatmul.mubr.f32.gmra.mxu0 %v750
    %v851 = vpop.f32.mrf.mxu0
    %v852 = vadd.f32 0.0, %v851
    %v853 = vpop.f32.mrf.mxu0
    %854 = vmatprep.mubr.f32.mxu0 0.0
    %855 = vmatmul.mubr.f32.gmra.mxu0 %v753
    %v856 = vpop.f32.mrf.mxu0
    %v857 = vadd.f32 0.0, %v856
    %v858 = vpop.f32.mrf.mxu0
    %859 = vdwg.mxu0
    %v860 = vmul.f32 %v822, %v53
    %v861 = vmul.f32 %v827, %v54
    %v862 = vmul.f32 %v832, %v55
    %v863 = vmul.f32 %v837, %v56
    %v864 = vmul.f32 %v842, %v57
    %v865 = vmul.f32 %v847, %v58
    %v866 = vmul.f32 %v852, %v59
    %v867 = vmul.f32 %v857, %v60
    %868 = vrot.lane.b32.xlu0 %v322, 112
    %v869 = vpop.permute.xlu0 %868
    %870 = vrot.lane.b32.xlu0 %v327, 112
    %v871 = vpop.permute.xlu0 %870
    %872 = vrot.lane.b32.xlu0 %v332, 112
    %v873 = vpop.permute.xlu0 %872
    %874 = vrot.lane.b32.xlu0 %v337, 112
    %v875 = vpop.permute.xlu0 %874
    %876 = vrot.lane.b32.xlu0 %v342, 112
    %v877 = vpop.permute.xlu0 %876
    %878 = vrot.lane.b32.xlu0 %v347, 112
    %v879 = vpop.permute.xlu0 %878
    %880 = vrot.lane.b32.xlu0 %v352, 112
    %v881 = vpop.permute.xlu0 %880
    %882 = vrot.lane.b32.xlu0 %v357, 112
    %v883 = vpop.permute.xlu0 %882
    %v893 = vsel %vm538, %v860, 0
    %v896 = vsel %vm538, %v861, 0
    %v899 = vsel %vm538, %v862, 0
    %v902 = vsel %vm538, %v863, 0
    %v905 = vsel %vm538, %v864, 0
    %v908 = vsel %vm538, %v865, 0
    %v911 = vsel %vm538, %v866, 0
    %v914 = vsel %vm538, %v867, 0
    %916 = vmatprep.subr.mxu0 0.0
    %917 = vmatpush1.msra.mxu0 0.0
    %918 = vmatprep.subr.mxu0 0.0
    %919 = vmatpush1.msra.mxu0 0.0
    %920 = vmatprep.subr.mxu0 0.0
    %921 = vmatpush1.msra.mxu0 0.0
    %922 = vmatprep.subr.mxu0 0.0
    %923 = vmatpush1.msra.mxu0 0.0
    %924 = vmatprep.subr.mxu0 0.0
    %925 = vmatpush1.msra.mxu0 0.0
    %926 = vmatprep.subr.mxu0 0.0
    %927 = vmatpush1.msra.mxu0 0.0
    %928 = vmatprep.subr.mxu0 0.0
    %929 = vmatpush1.msra.mxu0 0.0
    %930 = vmatprep.subr.mxu0 0.0
    %931 = vmatpush1.msra.mxu0 0.0
    %932 = vmatprep.subr.mxu0 0.0
    %933 = vmatpush1.msra.mxu0 %v883
    %934 = vmatprep.subr.mxu0 0.0
    %935 = vmatpush1.msra.mxu0 %v881
    %936 = vmatprep.subr.mxu0 0.0
    %937 = vmatpush1.msra.mxu0 %v879
    %938 = vmatprep.subr.mxu0 0.0
    %939 = vmatpush1.msra.mxu0 %v877
    %940 = vmatprep.subr.mxu0 0.0
    %941 = vmatpush1.msra.mxu0 %v875
    %942 = vmatprep.subr.mxu0 0.0
    %943 = vmatpush1.msra.mxu0 %v873
    %944 = vmatprep.subr.mxu0 0.0
    %945 = vmatpush1.msra.mxu0 %v871
    %946 = vmatprep.subr.mxu0 0.0
    %947 = vmatpush1.msra.mxu0 %v869
    %948 = vmatprep.subr.mxu0 0.0
    %949 = vmatpush2.msra.mxu0 0.0
    %950 = vmatprep.subr.mxu0 0.0
    %951 = vmatpush2.msra.mxu0 0.0
    %952 = vmatprep.subr.mxu0 0.0
    %953 = vmatpush2.msra.mxu0 0.0
    %954 = vmatprep.subr.mxu0 0.0
    %955 = vmatpush2.msra.mxu0 0.0
    %956 = vmatprep.subr.mxu0 0.0
    %957 = vmatpush2.msra.mxu0 0.0
    %958 = vmatprep.subr.mxu0 0.0
    %959 = vmatpush2.msra.mxu0 0.0
    %960 = vmatprep.subr.mxu0 0.0
    %961 = vmatpush2.msra.mxu0 0.0
    %962 = vmatprep.subr.mxu0 0.0
    %963 = vmatpush2.msra.mxu0 0.0
    %964 = vmatprep.subr.mxu0 0.0
    %965 = vmatpush2.msra.mxu0 0.0
    %966 = vmatprep.subr.mxu0 0.0
    %967 = vmatpush2.msra.mxu0 0.0
    %968 = vmatprep.subr.mxu0 0.0
    %969 = vmatpush2.msra.mxu0 0.0
    %970 = vmatprep.subr.mxu0 0.0
    %971 = vmatpush2.msra.mxu0 0.0
    %972 = vmatprep.subr.mxu0 0.0
    %973 = vmatpush2.msra.mxu0 0.0
    %974 = vmatprep.subr.mxu0 0.0
    %975 = vmatpush2.msra.mxu0 0.0
    %976 = vmatprep.subr.mxu0 0.0
    %977 = vmatpush2.msra.mxu0 0.0
    %978 = vmatprep.subr.mxu0 0.0
    %979 = vmatpush2.msra.mxu0 0.0
    %980 = vmatprep.mubr.f32.mxu0 0.0
    %981 = vmatmul.mubr.f32.gmra.mxu0 %v893
    %v982 = vpop.f32.mrf.mxu0
    %v983 = vadd.f32 0.0, %v982
    %v984 = vpop.f32.mrf.mxu0
    %985 = vmatprep.mubr.f32.mxu0 0.0
    %986 = vmatmul.mubr.f32.gmra.mxu0 %v896
    %v987 = vpop.f32.mrf.mxu0
    %v988 = vadd.f32 0.0, %v987
    %v989 = vpop.f32.mrf.mxu0
    %990 = vmatprep.mubr.f32.mxu0 0.0
    %991 = vmatmul.mubr.f32.gmra.mxu0 %v899
    %v992 = vpop.f32.mrf.mxu0
    %v993 = vadd.f32 0.0, %v992
    %v994 = vpop.f32.mrf.mxu0
    %995 = vmatprep.mubr.f32.mxu0 0.0
    %996 = vmatmul.mubr.f32.gmra.mxu0 %v902
    %v997 = vpop.f32.mrf.mxu0
    %v998 = vadd.f32 0.0, %v997
    %v999 = vpop.f32.mrf.mxu0
    %1000 = vmatprep.mubr.f32.mxu0 0.0
    %1001 = vmatmul.mubr.f32.gmra.mxu0 %v905
    %v1002 = vpop.f32.mrf.mxu0
    %v1003 = vadd.f32 0.0, %v1002
    %v1004 = vpop.f32.mrf.mxu0
    %1005 = vmatprep.mubr.f32.mxu0 0.0
    %1006 = vmatmul.mubr.f32.gmra.mxu0 %v908
    %v1007 = vpop.f32.mrf.mxu0
    %v1008 = vadd.f32 0.0, %v1007
    %v1009 = vpop.f32.mrf.mxu0
    %1010 = vmatprep.mubr.f32.mxu0 0.0
    %1011 = vmatmul.mubr.f32.gmra.mxu0 %v911
    %v1012 = vpop.f32.mrf.mxu0
    %v1013 = vadd.f32 0.0, %v1012
    %v1014 = vpop.f32.mrf.mxu0
    %1015 = vmatprep.mubr.f32.mxu0 0.0
    %1016 = vmatmul.mubr.f32.gmra.mxu0 %v914
    %v1017 = vpop.f32.mrf.mxu0
    %v1018 = vadd.f32 0.0, %v1017
    %v1019 = vpop.f32.mrf.mxu0
    %1020 = vdwg.mxu0
    %v1021 = vld [vmem:[%s10] sm:$0xff]
    %v1023 = vsel %vm384, %v983, 0
    %v1026 = vsel %vm384, %v988, 0
    %v1029 = vsel %vm384, %v993, 0
    %v1032 = vsel %vm384, %v998, 0
    %v1035 = vsel %vm384, %v1003, 0
    %v1038 = vsel %vm384, %v1008, 0
    %v1041 = vsel %vm384, %v1013, 0
    %v1044 = vsel %vm384, %v1018, 0
    %1046 = vmatprep.subr.mxu0 0.0
    %1047 = vmatpush1.msra.mxu0 0.0
    %1048 = vmatprep.subr.mxu0 0.0
    %1049 = vmatpush1.msra.mxu0 0.0
    %1050 = vmatprep.subr.mxu0 0.0
    %1051 = vmatpush1.msra.mxu0 0.0
    %1052 = vmatprep.subr.mxu0 0.0
    %1053 = vmatpush1.msra.mxu0 0.0
    %1054 = vmatprep.subr.mxu0 0.0
    %1055 = vmatpush1.msra.mxu0 0.0
    %1056 = vmatprep.subr.mxu0 0.0
    %1057 = vmatpush1.msra.mxu0 0.0
    %1058 = vmatprep.subr.mxu0 0.0
    %1059 = vmatpush1.msra.mxu0 0.0
    %1060 = vmatprep.subr.mxu0 0.0
    %1061 = vmatpush1.msra.mxu0 0.0
    %1062 = vmatprep.subr.mxu0 0.0
    %1063 = vmatpush1.msra.mxu0 0.0
    %1064 = vmatprep.subr.mxu0 0.0
    %1065 = vmatpush1.msra.mxu0 0.0
    %1066 = vmatprep.subr.mxu0 0.0
    %1067 = vmatpush1.msra.mxu0 0.0
    %1068 = vmatprep.subr.mxu0 0.0
    %1069 = vmatpush1.msra.mxu0 0.0
    %1070 = vmatprep.subr.mxu0 0.0
    %1071 = vmatpush1.msra.mxu0 0.0
    %1072 = vmatprep.subr.mxu0 0.0
    %1073 = vmatpush1.msra.mxu0 0.0
    %1074 = vmatprep.subr.mxu0 0.0
    %1075 = vmatpush1.msra.mxu0 0.0
    %1076 = vmatprep.subr.mxu0 0.0
    %1077 = vmatpush1.msra.mxu0 %v1021
    %1078 = vmatprep.subr.mxu0 0.0
    %1079 = vmatpush2.msra.mxu0 0.0
    %1080 = vmatprep.subr.mxu0 0.0
    %1081 = vmatpush2.msra.mxu0 0.0
    %1082 = vmatprep.subr.mxu0 0.0
    %1083 = vmatpush2.msra.mxu0 0.0
    %1084 = vmatprep.subr.mxu0 0.0
    %1085 = vmatpush2.msra.mxu0 0.0
    %1086 = vmatprep.subr.mxu0 0.0
    %1087 = vmatpush2.msra.mxu0 0.0
    %1088 = vmatprep.subr.mxu0 0.0
    %1089 = vmatpush2.msra.mxu0 0.0
    %1090 = vmatprep.subr.mxu0 0.0
    %1091 = vmatpush2.msra.mxu0 0.0
    %1092 = vmatprep.subr.mxu0 0.0
    %1093 = vmatpush2.msra.mxu0 0.0
    %1094 = vmatprep.subr.mxu0 0.0
    %1095 = vmatpush2.msra.mxu0 0.0
    %1096 = vmatprep.subr.mxu0 0.0
    %1097 = vmatpush2.msra.mxu0 0.0
    %1098 = vmatprep.subr.mxu0 0.0
    %1099 = vmatpush2.msra.mxu0 0.0
    %1100 = vmatprep.subr.mxu0 0.0
    %1101 = vmatpush2.msra.mxu0 0.0
    %1102 = vmatprep.subr.mxu0 0.0
    %1103 = vmatpush2.msra.mxu0 0.0
    %1104 = vmatprep.subr.mxu0 0.0
    %1105 = vmatpush2.msra.mxu0 0.0
    %1106 = vmatprep.subr.mxu0 0.0
    %1107 = vmatpush2.msra.mxu0 0.0
    %1108 = vmatprep.subr.mxu0 0.0
    %1109 = vmatpush2.msra.mxu0 0.0
    %1110 = vmatprep.mubr.f32.mxu0 0.0
    %1111 = vmatmul.mubr.f32.gmra.mxu0 %v1023
    %v1112 = vpop.f32.mrf.mxu0
    %v1113 = vadd.f32 0.0, %v1112
    %v1114 = vpop.f32.mrf.mxu0
    %1115 = vmatprep.mubr.f32.mxu0 0.0
    %1116 = vmatmul.mubr.f32.gmra.mxu0 %v1026
    %v1117 = vpop.f32.mrf.mxu0
    %v1118 = vadd.f32 0.0, %v1117
    %v1119 = vpop.f32.mrf.mxu0
    %1120 = vmatprep.mubr.f32.mxu0 0.0
    %1121 = vmatmul.mubr.f32.gmra.mxu0 %v1029
    %v1122 = vpop.f32.mrf.mxu0
    %v1123 = vadd.f32 0.0, %v1122
    %v1124 = vpop.f32.mrf.mxu0
    %1125 = vmatprep.mubr.f32.mxu0 0.0
    %1126 = vmatmul.mubr.f32.gmra.mxu0 %v1032
    %v1127 = vpop.f32.mrf.mxu0
    %v1128 = vadd.f32 0.0, %v1127
    %v1129 = vpop.f32.mrf.mxu0
    %1130 = vmatprep.mubr.f32.mxu0 0.0
    %1131 = vmatmul.mubr.f32.gmra.mxu0 %v1035
    %v1132 = vpop.f32.mrf.mxu0
    %v1133 = vadd.f32 0.0, %v1132
    %v1134 = vpop.f32.mrf.mxu0
    %1135 = vmatprep.mubr.f32.mxu0 0.0
    %1136 = vmatmul.mubr.f32.gmra.mxu0 %v1038
    %v1137 = vpop.f32.mrf.mxu0
    %v1138 = vadd.f32 0.0, %v1137
    %v1139 = vpop.f32.mrf.mxu0
    %1140 = vmatprep.mubr.f32.mxu0 0.0
    %1141 = vmatmul.mubr.f32.gmra.mxu0 %v1041
    %v1142 = vpop.f32.mrf.mxu0
    %v1143 = vadd.f32 0.0, %v1142
    %v1144 = vpop.f32.mrf.mxu0
    %1145 = vmatprep.mubr.f32.mxu0 0.0
    %1146 = vmatmul.mubr.f32.gmra.mxu0 %v1044
    %v1147 = vpop.f32.mrf.mxu0
    %v1148 = vadd.f32 0.0, %v1147
    %v1149 = vpop.f32.mrf.mxu0
    %1150 = vdwg.mxu0
    %v1151 = vld [vmem:[%s11] sm:$0xff]
    %v1152 = vld [vmem:[%s11 + $0x8] sm:$0xff]
    %v1153 = vld [vmem:[%s11 + $0x10] sm:$0xff]
    %v1154 = vld [vmem:[%s11 + $0x18] sm:$0xff]
    %v1155 = vld [vmem:[%s11 + $0x20] sm:$0xff]
    %v1156 = vld [vmem:[%s11 + $0x28] sm:$0xff]
    %v1157 = vld [vmem:[%s11 + $0x30] sm:$0xff]
    %v1158 = vld [vmem:[%s11 + $0x38] sm:$0xff]
    %v1159 = vmul.f32 %v1113, %v1151
    %v1160 = vmul.f32 %v1118, %v1152
    %v1161 = vmul.f32 %v1123, %v1153
    %v1162 = vmul.f32 %v1128, %v1154
    %v1163 = vmul.f32 %v1133, %v1155
    %v1164 = vmul.f32 %v1138, %v1156
    %v1165 = vmul.f32 %v1143, %v1157
    %v1166 = vmul.f32 %v1148, %v1158
    %v1167 = vld [vmem:[%s12] sm:$0xff]
    %v1168 = vld [vmem:[%s12 + $0x8] sm:$0xff]
    %v1170 = vsel %vm538, %v1167, 0
    %v1173 = vsel %vm538, %v1168, 0
    %1175 = vmatprep.subr.mxu0 0.0
    %1176 = vmatpush1.msra.mxu0 0.0
    %1177 = vmatprep.subr.mxu0 0.0
    %1178 = vmatpush1.msra.mxu0 0.0
    %1179 = vmatprep.subr.mxu0 0.0
    %1180 = vmatpush1.msra.mxu0 0.0
    %1181 = vmatprep.subr.mxu0 0.0
    %1182 = vmatpush1.msra.mxu0 0.0
    %1183 = vmatprep.subr.mxu0 0.0
    %1184 = vmatpush1.msra.mxu0 0.0
    %1185 = vmatprep.subr.mxu0 0.0
    %1186 = vmatpush1.msra.mxu0 0.0
    %1187 = vmatprep.subr.mxu0 0.0
    %1188 = vmatpush1.msra.mxu0 0.0
    %1189 = vmatprep.subr.mxu0 0.0
    %1190 = vmatpush1.msra.mxu0 0.0
    %1191 = vmatprep.subr.mxu0 0.0
    %1192 = vmatpush1.msra.mxu0 %v1166
    %1193 = vmatprep.subr.mxu0 0.0
    %1194 = vmatpush1.msra.mxu0 %v1165
    %1195 = vmatprep.subr.mxu0 0.0
    %1196 = vmatpush1.msra.mxu0 %v1164
    %1197 = vmatprep.subr.mxu0 0.0
    %1198 = vmatpush1.msra.mxu0 %v1163
    %1199 = vmatprep.subr.mxu0 0.0
    %1200 = vmatpush1.msra.mxu0 %v1162
    %1201 = vmatprep.subr.mxu0 0.0
    %1202 = vmatpush1.msra.mxu0 %v1161
    %1203 = vmatprep.subr.mxu0 0.0
    %1204 = vmatpush1.msra.mxu0 %v1160
    %1205 = vmatprep.subr.mxu0 0.0
    %1206 = vmatpush1.msra.mxu0 %v1159
    %1207 = vmatprep.subr.mxu0 0.0
    %1208 = vmatpush2.msra.mxu0 0.0
    %1209 = vmatprep.subr.mxu0 0.0
    %1210 = vmatpush2.msra.mxu0 0.0
    %1211 = vmatprep.subr.mxu0 0.0
    %1212 = vmatpush2.msra.mxu0 0.0
    %1213 = vmatprep.subr.mxu0 0.0
    %1214 = vmatpush2.msra.mxu0 0.0
    %1215 = vmatprep.subr.mxu0 0.0
    %1216 = vmatpush2.msra.mxu0 0.0
    %1217 = vmatprep.subr.mxu0 0.0
    %1218 = vmatpush2.msra.mxu0 0.0
    %1219 = vmatprep.subr.mxu0 0.0
    %1220 = vmatpush2.msra.mxu0 0.0
    %1221 = vmatprep.subr.mxu0 0.0
    %1222 = vmatpush2.msra.mxu0 0.0
    %1223 = vmatprep.subr.mxu0 0.0
    %1224 = vmatpush2.msra.mxu0 0.0
    %1225 = vmatprep.subr.mxu0 0.0
    %1226 = vmatpush2.msra.mxu0 0.0
    %1227 = vmatprep.subr.mxu0 0.0
    %1228 = vmatpush2.msra.mxu0 0.0
    %1229 = vmatprep.subr.mxu0 0.0
    %1230 = vmatpush2.msra.mxu0 0.0
    %1231 = vmatprep.subr.mxu0 0.0
    %1232 = vmatpush2.msra.mxu0 0.0
    %1233 = vmatprep.subr.mxu0 0.0
    %1234 = vmatpush2.msra.mxu0 0.0
    %1235 = vmatprep.subr.mxu0 0.0
    %1236 = vmatpush2.msra.mxu0 0.0
    %1237 = vmatprep.subr.mxu0 0.0
    %1238 = vmatpush2.msra.mxu0 0.0
    %1239 = vmatprep.mubr.f32.mxu0 0.0
    %1240 = vmatmul.mubr.f32.gmra.mxu0 %v1170
    %v1241 = vpop.f32.mrf.mxu0
    %v1242 = vadd.f32 0.0, %v1241
    %v1243 = vpop.f32.mrf.mxu0
    %1244 = vmatprep.mubr.f32.mxu0 0.0
    %1245 = vmatmul.mubr.f32.gmra.mxu0 %v1173
    %v1246 = vpop.f32.mrf.mxu0
    %v1247 = vadd.f32 0.0, %v1246
    %v1248 = vpop.f32.mrf.mxu0
    %1249 = vdwg.mxu0
    %v1250 = vld [vmem:[%s3] sm:$0xff]
    %v1251 = vld [vmem:[%s3 + $0x8] sm:$0xff]
    %v1252 = vld [vmem:[%s3 + $0x10] sm:$0xff]
    %v1253 = vld [vmem:[%s3 + $0x18] sm:$0xff]
    %v1254 = vld [vmem:[%s4] sm:$0x1]
    %v1256 = vlaneseq
    %v1257 = vshrl.u32 %v1256, 7
    %v1258 = vsub.s32 0, %v1257
    %v1259 = vrot.slane %v1254, %v1258
    %v1262 = vsel %vm72, %v1242, 0
    %v1265 = vsel %vm72, %v1247, 0
    %1267 = vmatprep.subr.mxu0 0.0
    %1268 = vmatpush1.msra.mxu0 0.0
    %1269 = vmatprep.subr.mxu0 0.0
    %1270 = vmatpush1.msra.mxu0 0.0
    %1271 = vmatprep.subr.mxu0 0.0
    %1272 = vmatpush1.msra.mxu0 0.0
    %1273 = vmatprep.subr.mxu0 0.0
    %1274 = vmatpush1.msra.mxu0 0.0
    %1275 = vmatprep.subr.mxu0 0.0
    %1276 = vmatpush1.msra.mxu0 0.0
    %1277 = vmatprep.subr.mxu0 0.0
    %1278 = vmatpush1.msra.mxu0 0.0
    %1279 = vmatprep.subr.mxu0 0.0
    %1280 = vmatpush1.msra.mxu0 0.0
    %1281 = vmatprep.subr.mxu0 0.0
    %1282 = vmatpush1.msra.mxu0 0.0
    %1283 = vmatprep.subr.mxu0 0.0
    %1284 = vmatpush1.msra.mxu0 0.0
    %1285 = vmatprep.subr.mxu0 0.0
    %1286 = vmatpush1.msra.mxu0 0.0
    %1287 = vmatprep.subr.mxu0 0.0
    %1288 = vmatpush1.msra.mxu0 0.0
    %1289 = vmatprep.subr.mxu0 0.0
    %1290 = vmatpush1.msra.mxu0 0.0
    %1291 = vmatprep.subr.mxu0 0.0
    %1292 = vmatpush1.msra.mxu0 %v1253
    %1293 = vmatprep.subr.mxu0 0.0
    %1294 = vmatpush1.msra.mxu0 %v1252
    %1295 = vmatprep.subr.mxu0 0.0
    %1296 = vmatpush1.msra.mxu0 %v1251
    %1297 = vmatprep.subr.mxu0 0.0
    %1298 = vmatpush1.msra.mxu0 %v1250
    %1299 = vmatprep.subr.mxu0 0.0
    %1300 = vmatpush2.msra.mxu0 0.0
    %1301 = vmatprep.subr.mxu0 0.0
    %1302 = vmatpush2.msra.mxu0 0.0
    %1303 = vmatprep.subr.mxu0 0.0
    %1304 = vmatpush2.msra.mxu0 0.0
    %1305 = vmatprep.subr.mxu0 0.0
    %1306 = vmatpush2.msra.mxu0 0.0
    %1307 = vmatprep.subr.mxu0 0.0
    %1308 = vmatpush2.msra.mxu0 0.0
    %1309 = vmatprep.subr.mxu0 0.0
    %1310 = vmatpush2.msra.mxu0 0.0
    %1311 = vmatprep.subr.mxu0 0.0
    %1312 = vmatpush2.msra.mxu0 0.0
    %1313 = vmatprep.subr.mxu0 0.0
    %1314 = vmatpush2.msra.mxu0 0.0
    %1315 = vmatprep.subr.mxu0 0.0
    %1316 = vmatpush2.msra.mxu0 0.0
    %1317 = vmatprep.subr.mxu0 0.0
    %1318 = vmatpush2.msra.mxu0 0.0
    %1319 = vmatprep.subr.mxu0 0.0
    %1320 = vmatpush2.msra.mxu0 0.0
    %1321 = vmatprep.subr.mxu0 0.0
    %1322 = vmatpush2.msra.mxu0 0.0
    %1323 = vmatprep.subr.mxu0 0.0
    %1324 = vmatpush2.msra.mxu0 0.0
    %1325 = vmatprep.subr.mxu0 0.0
    %1326 = vmatpush2.msra.mxu0 0.0
    %1327 = vmatprep.subr.mxu0 0.0
    %1328 = vmatpush2.msra.mxu0 0.0
    %1329 = vmatprep.subr.mxu0 0.0
    %1330 = vmatpush2.msra.mxu0 0.0
    %1331 = vmatprep.mubr.f32.mxu0 0.0
    %1332 = vmatmul.mubr.f32.gmra.mxu0 %v1262
    %v1333 = vpop.f32.mrf.mxu0
    %v1334 = vadd.f32 %v1259, %v1333
    %v1335 = vpop.f32.mrf.mxu0
    %1336 = vmatprep.mubr.f32.mxu0 0.0
    %1337 = vmatmul.mubr.f32.gmra.mxu0 %v1265
    %v1338 = vpop.f32.mrf.mxu0
    %v1339 = vadd.f32 %v1259, %v1338
    %v1340 = vpop.f32.mrf.mxu0
    %1341 = vdwg.mxu0
    %1342 = vst.msk [vmem:[#allocation2] sm:$0xff] %vm72, %v1334
    %1343 = vst.msk [vmem:[#allocation2 + $0x8] sm:$0xff] %vm72, %v1339
    // Predicated region
    $region54: #{multihead_attention.1} parent=1 // pred_check
      _
    $region55: #{multihead_attention.1} parent=1 // pred_check_branch
      %1345 = sbr.rel (0) target = $region57
    $region56: #{multihead_attention.1} parent=1 // pred_region
      %s1347 = ssub.s32 256, 256
      %1348 = vsyncadd [#allocation3], %s1347
      %s1349 = sshll.u32 [#allocation2], 4
      %s1350 = int_to_ptr.vmem [resolvable:$true] %s1349
      %1355 = dma.vmem_to_hbm [thread:$0]  %s1350, 256, %s13, [#allocation3], 128, 128, 8
    $region57: #{multihead_attention.1} parent=1 // pred_fallthru
      _
    // Predicated region
    $region58: #{multihead_attention.1} parent=1 // pred_check
      _
    $region59: #{multihead_attention.1} parent=1 // pred_check_branch
      %1357 = sbr.rel (0) target = $region61
    $region60: #{multihead_attention.1} parent=1 // pred_region
      %1358 = dma.done [#allocation3], 256
    $region61: #{multihead_attention.1} parent=1 // pred_fallthru
      _
    %1359 = vsyncpa [#allocation3], 1

</llo_original>
